<compile_context>
chip_gen: v5e
topology: v5e:2x2
jax: 0.10.0
libtpu: 0.0.40
codegen_flags: <defaults>
</compile_context>

<pallas_src>
import numpy as np
import jax
import jax.numpy as jnp
from jax.experimental import pallas as pl
from jax.experimental.pallas import tpu as pltpu


# ----------------------------------------------------------------------------- helpers


def _bilinear_matrix(out_size: int, in_size: int, scale: float) -> np.ndarray:
    """Row-interpolation matrix reproducing F.interpolate(bilinear, align_corners=False)."""
    i = np.arange(out_size, dtype=np.float64)
    src = (i + 0.5) / scale - 0.5
    src = np.maximum(src, 0.0)                      # PyTorch clamps negative source coords
    i0 = np.minimum(np.floor(src).astype(np.int64), in_size - 1)
    i1 = np.minimum(i0 + 1, in_size - 1)
    frac = src - np.floor(src)
    A = np.zeros((out_size, in_size), dtype=np.float32)
    rows = np.arange(out_size)
    A[rows, i0] += (1.0 - frac).astype(np.float32)
    A[rows, i1] += frac.astype(np.float32)
    return A


def _build_tap_matrices(conv_w, W8: int):
    """Fold the channel sum and the kj (column) taps of the 3x3 conv into 3 matrices.

    Returns M with shape (3, (W8+2)*C, W8) such that, with feat laid out channel-minor
    and spatially zero-padded as F[h_pad, wp*C + c],
        conv_out[h, w] = sum_ki  ( F[h+ki, :] @ M[ki] )[w]
    reproduces PyTorch Conv2d(C, 1, k=3, s=1, p=1) exactly (cross-correlation).
    """
    C = conv_w.shape[1]
    Wp = W8 + 2
    taps = jnp.transpose(conv_w[0].astype(jnp.float32), (1, 2, 0))     # (ki, kj, c)
    wp = jnp.arange(Wp)[:, None]                                        # (Wp, 1)
    w = jnp.arange(W8)[None, :]                                         # (1, W8)
    ms = []
    for ki in range(3):
        m = jnp.zeros((Wp, C, W8), jnp.float32)
        for kj in range(3):
            sel = (wp == (w + kj)).astype(jnp.float32)                  # (Wp, W8)
            m = m + sel[:, None, :] * taps[ki, kj][None, :, None]       # (Wp, C, W8)
        ms.append(m.reshape(Wp * C, W8))
    return jnp.stack(ms, axis=0)                                        # (3, Wp*C, W8)


def _default_out_block_bytes() -> int:
    """Size budget for one (TH, W) output block, scaled to the chip's VMEM."""
    try:
        cap = pltpu.get_tpu_info().vmem_capacity_bytes      # 128 MiB v5e/v6e, 64 MiB v7x
    except Exception:
        cap = 64 << 20
    return max(1 << 20, cap // 8)          # double-buffered block stays <= 1/4 of VMEM


def _pick_row_tile(H: int, W: int, max_block_bytes: int, max_rows: int = 1024) -> int:
    """Largest TH (multiple of 8, divides H) with TH*W*4 <= max_block_bytes."""
    cap = max(8, min(max_rows, (max_block_bytes // (4 * max(W, 1))) // 8 * 8))
    th = 8
    for cand in range(8, H + 1, 8):
        if H % cand == 0 and cand <= cap:
            th = cand
    return th


def _vmem_limit(nbytes: int, headroom: int = 4 << 20) -> int:
    return int(min(max(nbytes + headroom, 16 << 20), 100 << 20))


# ----------------------------------------------------------------------------- kernels


def _conv_colup_kernel(bias_ref, feat_ref, m_ref, awt_ref, tmp_ref):
    # bias_ref: (1,) f32 in SMEM
    # feat_ref: (1, H8+2, (W8+2)*C)   lane-dense, channel-minor, zero-padded spatially
    # m_ref:    (3, (W8+2)*C, W8)     folded conv tap matrices (VMEM)
    # awt_ref:  (W8, W)               column-upsample matrix (A_w^T)
    # tmp_ref:  (1, H8, W)            sigmoid(conv) @ A_w^T for this image
    H8 = tmp_ref.shape[1]
    # 3x3 conv as 3 MXU matmuls (one per row tap ki); channel + column taps are
    # contracted inside the matmul.
    acc = jnp.dot(feat_ref[0, 0:H8, :], m_ref[0], preferred_element_type=jnp.float32)
    acc = acc + jnp.dot(feat_ref[0, 1:H8 + 1, :], m_ref[1],
                        preferred_element_type=jnp.float32)
    acc = acc + jnp.dot(feat_ref[0, 2:H8 + 2, :], m_ref[2],
                        preferred_element_type=jnp.float32)
    sig = jax.nn.sigmoid(acc + bias_ref[0])                              # (H8, W8)
    tmp_ref[0] = jnp.dot(sig, awt_ref[...], preferred_element_type=jnp.float32)


def _row_upsample_kernel(tmp_ref, ah_ref, out_ref):
    # tmp_ref: (1, H8, W);  ah_ref: (TH, H8);  out_ref: (1, 1, TH, W)
    out_ref[0, 0] = jnp.dot(ah_ref[...], tmp_ref[0],
                            preferred_element_type=jnp.float32).astype(out_ref.dtype)


# ----------------------------------------------------------------------------- wrapper


def foreground3c_head(feat_nchw, conv_w, conv_b, *, out_block_bytes: int | None = None):
    """new_classifier (conv3x3 + sigmoid) followed by x8 bilinear upsample.

    feat_nchw: (N, 21, H8, W8) float32  -- output of deeplab classifier (NCHW)
    conv_w:    (1, 21, 3, 3)            -- PyTorch Conv2d weight layout
    conv_b:    (1,)
    returns:   (N, 1, 8*H8, 8*W8) float32
    """
    N, C, H8, W8 = feat_nchw.shape
    H, W = 8 * H8, 8 * W8
    Wp = W8 + 2
    K = Wp * C
    itemsize = 4

    # Lane-dense channel-minor layout with the spatial zero-pad baked in:
    # (N, C, H8, W8) -> (N, H8+2, (W8+2)*C).  Single layout-prep copy in XLA (the
    # NCHW->NHWC transpose is required for the MXU conv formulation anyway; the pad
    # fuses into it, so no extra HBM round trip beyond the transpose).
    feat_nhwc = jnp.transpose(feat_nchw.astype(jnp.float32), (0, 2, 3, 1))
    feat_flat = jnp.pad(feat_nhwc, ((0, 0), (1, 1), (1, 1), (0, 0))).reshape(N, H8 + 2, K)

    m = _build_tap_matrices(conv_w, W8)                                  # (3, K, W8)
    bias = conv_b.reshape(1).astype(jnp.float32)
    ah = jnp.asarray(_bilinear_matrix(H, H8, 8.0))                       # (H, H8)
    awt = jnp.asarray(_bilinear_matrix(W, W8, 8.0)).T                    # (W8, W)

    # ---------------- kernel A: conv + bias + sigmoid + column upsample (per image)
    feat_blk = (H8 + 2) * K * itemsize
    m_bytes = 3 * K * W8 * itemsize
    awt_bytes = W8 * W * itemsize
    tmp_blk = H8 * W * itemsize
    vmem_a = _vmem_limit(2 * (feat_blk + m_bytes + awt_bytes + tmp_blk)
                         + 4 * H8 * W8 * itemsize + 2 * tmp_blk)

    tmp = pl.pallas_call(
        _conv_colup_kernel,
        out_shape=jax.ShapeDtypeStruct((N, H8, W), jnp.float32),
        grid_spec=pltpu.PrefetchScalarGridSpec(
            num_scalar_prefetch=0,
            grid=(N,),
            in_specs=[
                pl.BlockSpec(memory_space=pltpu.MemorySpace.SMEM),        # bias scalar
                pl.BlockSpec((1, H8 + 2, K), lambda n: (n, 0, 0)),        # feat (lane-dense)
                pl.BlockSpec((3, K, W8), lambda n: (0, 0, 0)),            # folded conv taps
                pl.BlockSpec((W8, W), lambda n: (0, 0)),                  # A_w^T
            ],
            out_specs=pl.BlockSpec((1, H8, W), lambda n: (n, 0, 0)),
        ),
        compiler_params=pltpu.CompilerParams(
            dimension_semantics=("parallel",),
            vmem_limit_bytes=vmem_a,
        ),
    )(bias, feat_flat, m, awt)

    # ---------------- kernel B: row upsample, both grid axes parallel
    if out_block_bytes is None:
        out_block_bytes = _default_out_block_bytes()
    TH = _pick_row_tile(H, W, out_block_bytes)
    ah_blk = TH * H8 * itemsize
    out_blk = TH * W * itemsize
    vmem_b = _vmem_limit(2 * (tmp_blk + ah_blk + out_blk) + out_blk)

    out = pl.pallas_call(
        _row_upsample_kernel,
        out_shape=jax.ShapeDtypeStruct((N, 1, H, W), jnp.float32),
        grid_spec=pltpu.PrefetchScalarGridSpec(
            num_scalar_prefetch=0,
            grid=(N, H // TH),
            in_specs=[
                pl.BlockSpec((1, H8, W), lambda n, h: (n, 0, 0)),         # tmp for image n
                pl.BlockSpec((TH, H8), lambda n, h: (h, 0)),              # A_h row tile
            ],
            out_specs=pl.BlockSpec((1, 1, TH, W), lambda n, h: (n, 0, h, 0)),
        ),
        compiler_params=pltpu.CompilerParams(
            dimension_semantics=("parallel", "parallel"),
            vmem_limit_bytes=vmem_b,
        ),
    )(tmp, ah)
    return out


# ----------------------------------------------------------------------------- test


if __name__ == "__main__":
    key = jax.random.PRNGKey(0)
    kx, kpw, kpb, kcw, kcb = jax.random.split(key, 5)

    N, Cin, H, W = 2, 3, 128, 128
    x = jax.random.normal(kx, (N, Cin, H, W), dtype=jnp.float32)   # NCHW like PyTorch

    # TODO(synk): self.deeplab (ResNet backbone + ASPP classifier) is an externally
    # injected module not defined in Foreground3C; replaced here by a deterministic
    # stride-8 average pool + 1x1 projection producing 21-channel logits at H/8, W/8.
    proj_w = 0.1 * jax.random.normal(kpw, (Cin, 21), dtype=jnp.float32)
    proj_b = 0.01 * jax.random.normal(kpb, (21,), dtype=jnp.float32)
    x8 = x.reshape(N, Cin, H // 8, 8, W // 8, 8).mean(axis=(3, 5))        # (N, 3, 16, 16)
    feat = jnp.einsum("nchw,co->nohw", x8, proj_w) + proj_b[None, :, None, None]

    # new_classifier parameters: Conv2d(21, 1, kernel_size=3, padding=1) + bias
    conv_w = 0.1 * jax.random.normal(kcw, (1, 21, 3, 3), dtype=jnp.float32)
    conv_b = 0.01 * jax.random.normal(kcb, (1,), dtype=jnp.float32)

    out = foreground3c_head(feat, conv_w, conv_b)
    out = jax.block_until_ready(out)

    # Pure-XLA reference of the same head (conv3x3+bias+sigmoid, bilinear x8) at full f32.
    ref_pre = jax.lax.conv_general_dilated(
        feat, conv_w, window_strides=(1, 1), padding="SAME",
        dimension_numbers=("NCHW", "OIHW", "NCHW"),
        precision=jax.lax.Precision.HIGHEST)
    ref_sig = jax.nn.sigmoid(ref_pre + conv_b[None, :, None, None])
    ah_ref = jnp.asarray(_bilinear_matrix(H, H // 8, 8.0))
    awt_ref = jnp.asarray(_bilinear_matrix(W, W // 8, 8.0)).T
    ref = jnp.einsum("Hh,nchw,wW->ncHW", ah_ref, ref_sig, awt_ref,
                     precision=jax.lax.Precision.HIGHEST)

    assert out.shape == (N, 1, H, W), out.shape
    assert bool(jnp.all(jnp.isfinite(out)))
    assert bool(jnp.all((out >= 0.0) & (out <= 1.0 + 1e-6)))   # sigmoid range preserved
    err = float(jnp.max(jnp.abs(out - ref)))
    assert bool(jnp.allclose(out, ref, rtol=1e-4, atol=1e-4)), err
    print("KERNEL_OK")
</pallas_src>

<mosaic_0001>
module attributes {stable_mosaic.version = 11 : i64} {
  func.func @_conv_colup_kernel(%arg0: i32, %arg1: memref<1xf32, #tpu.memory_space<smem>>, %arg2: memref<1x18x378xf32, #tpu.memory_space<vmem>>, %arg3: memref<3x378x16xf32, #tpu.memory_space<vmem>>, %arg4: memref<16x128xf32, #tpu.memory_space<vmem>>, %arg5: memref<1x16x128xf32, #tpu.memory_space<vmem>>) attributes {dimension_semantics = [#tpu.dimension_semantics<parallel>], iteration_bounds = array<i64: 2>, scalar_prefetch = 0 : i64, scratch_operands = 0 : i64, tpu.core_type = #tpu.core_type<tc>, window_params = [{transform_indices = @transform_0, window_bounds = array<i64: 1>}, {transform_indices = @transform_1, window_bounds = array<i64: 1, 18, 378>}, {pipeline_mode = #tpu.pipeline_mode<synchronous>, transform_indices = @transform_2, window_bounds = array<i64: 3, 378, 16>}, {pipeline_mode = #tpu.pipeline_mode<synchronous>, transform_indices = @transform_3, window_bounds = array<i64: 16, 128>}, {transform_indices = @transform_4, window_bounds = array<i64: 1, 16, 128>}]} {
    %c0 = arith.constant 0 : index
    %c0_0 = arith.constant 0 : index
    %c0_1 = arith.constant 0 : index
    %0 = vector.load %arg2[%c0, %c0_0, %c0_1] : memref<1x18x378xf32, #tpu.memory_space<vmem>>, vector<1x16x378xf32>
    %1 = vector.shape_cast %0 : vector<1x16x378xf32> to vector<16x378xf32>
    %c0_2 = arith.constant 0 : index
    %c0_3 = arith.constant 0 : index
    %c0_4 = arith.constant 0 : index
    %2 = vector.load %arg3[%c0_2, %c0_3, %c0_4] : memref<3x378x16xf32, #tpu.memory_space<vmem>>, vector<1x378x16xf32>
    %3 = vector.shape_cast %2 : vector<1x378x16xf32> to vector<378x16xf32>
    %cst = arith.constant dense<0.000000e+00> : vector<16x16xf32>
    %4 = tpu.matmul %1, %3, %cst {dimension_numbers = #tpu.dot_dimension_numbers<[1], [0], [0], [1], [0, 0, 1, 1], [], []>} : vector<16x378xf32>, vector<378x16xf32>, vector<16x16xf32> -> vector<16x16xf32>
    %c0_5 = arith.constant 0 : index
    %c1 = arith.constant 1 : index
    %c0_6 = arith.constant 0 : index
    %5 = vector.load %arg2[%c0_5, %c1, %c0_6] : memref<1x18x378xf32, #tpu.memory_space<vmem>>, vector<1x16x378xf32>
    %6 = vector.shape_cast %5 : vector<1x16x378xf32> to vector<16x378xf32>
    %c1_7 = arith.constant 1 : index
    %c0_8 = arith.constant 0 : index
    %c0_9 = arith.constant 0 : index
    %7 = vector.load %arg3[%c1_7, %c0_8, %c0_9] : memref<3x378x16xf32, #tpu.memory_space<vmem>>, vector<1x378x16xf32>
    %8 = vector.shape_cast %7 : vector<1x378x16xf32> to vector<378x16xf32>
    %cst_10 = arith.constant dense<0.000000e+00> : vector<16x16xf32>
    %9 = tpu.matmul %6, %8, %cst_10 {dimension_numbers = #tpu.dot_dimension_numbers<[1], [0], [0], [1], [0, 0, 1, 1], [], []>} : vector<16x378xf32>, vector<378x16xf32>, vector<16x16xf32> -> vector<16x16xf32>
    %10 = arith.addf %4, %9 : vector<16x16xf32>
    %c0_11 = arith.constant 0 : index
    %c2 = arith.constant 2 : index
    %c0_12 = arith.constant 0 : index
    %11 = vector.load %arg2[%c0_11, %c2, %c0_12] : memref<1x18x378xf32, #tpu.memory_space<vmem>>, vector<1x16x378xf32>
    %12 = vector.shape_cast %11 : vector<1x16x378xf32> to vector<16x378xf32>
    %c2_13 = arith.constant 2 : index
    %c0_14 = arith.constant 0 : index
    %c0_15 = arith.constant 0 : index
    %13 = vector.load %arg3[%c2_13, %c0_14, %c0_15] : memref<3x378x16xf32, #tpu.memory_space<vmem>>, vector<1x378x16xf32>
    %14 = vector.shape_cast %13 : vector<1x378x16xf32> to vector<378x16xf32>
    %cst_16 = arith.constant dense<0.000000e+00> : vector<16x16xf32>
    %15 = tpu.matmul %12, %14, %cst_16 {dimension_numbers = #tpu.dot_dimension_numbers<[1], [0], [0], [1], [0, 0, 1, 1], [], []>} : vector<16x378xf32>, vector<378x16xf32>, vector<16x16xf32> -> vector<16x16xf32>
    %16 = arith.addf %10, %15 : vector<16x16xf32>
    %c0_17 = arith.constant 0 : index
    %17 = memref.load %arg1[%c0_17] : memref<1xf32, #tpu.memory_space<smem>>
    %18 = vector.broadcast %17 : f32 to vector<16x16xf32>
    %19 = arith.addf %16, %18 : vector<16x16xf32>
    %20 = arith.negf %19 : vector<16x16xf32>
    %21 = math.exp %20 : vector<16x16xf32>
    %cst_18 = arith.constant 1.000000e+00 : f32
    %22 = vector.broadcast %cst_18 : f32 to vector<16x16xf32>
    %23 = arith.addf %22, %21 : vector<16x16xf32>
    %24 = arith.divf %22, %23 : vector<16x16xf32>
    %c0_19 = arith.constant 0 : index
    %c0_20 = arith.constant 0 : index
    %25 = vector.load %arg4[%c0_19, %c0_20] : memref<16x128xf32, #tpu.memory_space<vmem>>, vector<16x128xf32>
    %cst_21 = arith.constant dense<0.000000e+00> : vector<16x128xf32>
    %26 = tpu.matmul %24, %25, %cst_21 {dimension_numbers = #tpu.dot_dimension_numbers<[1], [0], [0], [1], [0, 0, 1, 1], [], []>} : vector<16x16xf32>, vector<16x128xf32>, vector<16x128xf32> -> vector<16x128xf32>
    %c0_22 = arith.constant 0 : index
    %c0_23 = arith.constant 0 : index
    %c0_24 = arith.constant 0 : index
    %27 = vector.load %arg5[%c0_22, %c0_23, %c0_24] : memref<1x16x128xf32, #tpu.memory_space<vmem>>, vector<1x16x128xf32>
    %28 = vector.shape_cast %27 : vector<1x16x128xf32> to vector<16x128xf32>
    %29 = vector.shape_cast %26 : vector<16x128xf32> to vector<1x16x128xf32>
    tpu.vector_store %arg5[%c0_22, %c0_23, %c0_24], %29 {strides = array<i32>} : memref<1x16x128xf32, #tpu.memory_space<vmem>>, vector<1x16x128xf32>,
    return
  }
  func.func @transform_0(%arg0: i32) -> i32 {
    %c0_i32 = arith.constant 0 : i32
    %c0_i32_0 = arith.constant 0 : i32
    return %c0_i32 : i32
  }
  func.func @transform_1(%arg0: i32) -> (i32, i32, i32) {
    %c0_i32 = arith.constant 0 : i32
    %c0_i32_0 = arith.constant 0 : i32
    %c0_i32_1 = arith.constant 0 : i32
    return %arg0, %c0_i32, %c0_i32_0 : i32, i32, i32
  }
  func.func @transform_2(%arg0: i32) -> (i32, i32, i32) {
    %c0_i32 = arith.constant 0 : i32
    %c0_i32_0 = arith.constant 0 : i32
    %c0_i32_1 = arith.constant 0 : i32
    %c0_i32_2 = arith.constant 0 : i32
    return %c0_i32, %c0_i32_0, %c0_i32_1 : i32, i32, i32
  }
  func.func @transform_3(%arg0: i32) -> (i32, i32) {
    %c0_i32 = arith.constant 0 : i32
    %c0_i32_0 = arith.constant 0 : i32
    %c0_i32_1 = arith.constant 0 : i32
    return %c0_i32, %c0_i32_0 : i32, i32
  }
  func.func @transform_4(%arg0: i32) -> (i32, i32, i32) {
    %c0_i32 = arith.constant 0 : i32
    %c0_i32_0 = arith.constant 0 : i32
    %c0_i32_1 = arith.constant 0 : i32
    return %arg0, %c0_i32, %c0_i32_0 : i32, i32, i32
  }
}

</mosaic_0001>

<llo_original>
// kernel: tpu_custom_call.1
$region0: #{tpu_custom_call.1}
  #allocation0 [shape = 'u32[]', space=smem, size = 0x4, offset = 0x4, fixed_abs, tag = 'smem constant byte address 0x4 - core index']
  #allocation1 [shape = 'u32[72,128]{1,0:T(1,128)}', space=vmem, size = 0x9000, scoped, tag = 'internal scratch']
  #allocation2 [shape = 'f32[1]{0:T(128)S(6)}', space=smem, size = 0x200, scoped, tag = 'scoped memory for tpu_custom_call.1']
  %s0 = inlined_call_operand.<no memory space> [shape: f32[1], index: 0, kind: input, shape index: {}]
  %s1 = inlined_call_operand.vmem [shape: f32[2,18,378], index: 1, kind: input, shape index: {}]
  %s2 = inlined_call_operand.vmem [shape: f32[3,378,16], index: 2, kind: input, shape index: {}]
  %s3 = inlined_call_operand.vmem [shape: f32[16,128], index: 3, kind: input, shape index: {}]
  %s4 = inlined_call_operand.hbm [shape: f32[2,16,128], index: 4, kind: output, shape index: {}]
  %s5 = sld [smem:[#allocation0]]
  $region49: #{tpu_custom_call.1} parent=0
    _
  %s7 = ssub.s32 1, %s5
  %s8 = scalar_select 0, %s7, %s5
  %9 = sst [smem:[#allocation2]] %s0
  $region1: #{tpu_custom_call.1} parent=0
    #allocation3 [shape = 'u8[16384]{0}', space=vmem, size = 0x4000, scoped, tag = 'output window, operand 0']
    #allocation4 [shape = 's32[2]{0}', space=sflag, size = 0x8, scoped, tag = 'scoped memory for tpu_custom_call.1']
    %10 = vsyncpa [#allocation4], 0
    %s11 = scalar_lea.sflag [#allocation4], 1
    %12 = vsyncpa %s11, 0
    loop: start=0, step=1, limit=4
    $region2: #{tpu_custom_call.1} parent=1 // loop_pre_header
      _
    $region3: #{tpu_custom_call.1} parent=1 // loop_header
      %s14 = sphi 0, %s18
      %p15 = scmp.ge.s32.totalorder %s14, 4
      %s22 = sphi 0, %s22
      %s24 = sphi 0, %s22
      %s25 = sphi 0, %s24
      %s39 = sphi 0, %s25
      %s45 = sphi 0, %s47
      %s48 = sphi 0, %s45
      %s49 = sphi 0, %s48
      %s65 = sphi 0, %s49
      %s69 = sphi 0, %s69
      %s71 = sphi 0, %s69
      %s72 = sphi 0, %s71
      %s86 = sphi 0, %s72
      %s90 = sphi 0, %s90
      %s92 = sphi 0, %s90
      %s93 = sphi 0, %s92
      %s107 = sphi 0, %s93
      %s113 = sphi 0, %s115
      %s116 = sphi 0, %s113
      %s117 = sphi 0, %s116
      %s133 = sphi 0, %s117
    $region4: #{tpu_custom_call.1} parent=1 // loop_header_branch
      %17 = sbr.rel (%p15) target = $region8
    $region5: #{tpu_custom_call.1} parent=1 // loop_body
      %s19 = ssub.s32 %s14, 1
      %s20 = ssub.s32 %s14, 2
      %s21 = sadd.s32 %s14, 1
      %s23 = sadd.s32 %s22, 1
      %p26 = scmp.eq.s32.totalorder %s14, 1
      %p27 = scmp.ne.s32.totalorder %s22, %s24
      %p28 = scmp.eq.s32.totalorder %s14, 0
      %p29 = por %p27, %p28
      %p30 = scmp.ne.s32.totalorder %s22, %s24
      %p31 = scmp.eq.s32.totalorder %s19, 1
      %p32 = por %p30, %p31
      %p33 = scmp.ne.s32.totalorder %s24, %s25
      %p34 = scmp.eq.s32.totalorder %s19, 0
      %p35 = por %p33, %p34
      %p36 = scmp.ne.s32.totalorder %s24, %s25
      %p37 = scmp.eq.s32.totalorder %s20, 1
      %p38 = por %p36, %p37
      %p40 = scmp.ne.s32.totalorder %s25, %s39
      %p41 = scmp.eq.s32.totalorder %s20, 0
      %p42 = por %p40, %p41
      %s43 = ssub.s32 %s14, %s21
      %p44 = scmp.eq.s32.totalorder %s43, 0
      %s46 = sadd.s32 %s45, 1
      %s47 = scalar_select %p44, %s45, %s46
      %p50 = pneg %p44
      %p51 = scmp.eq.s32.totalorder %s14, 1
      %p52 = por %p50, %p51
      %p53 = scmp.ne.s32.totalorder %s45, %s48
      %p54 = scmp.eq.s32.totalorder %s14, 0
      %p55 = por %p53, %p54
      %p56 = scmp.ne.s32.totalorder %s45, %s48
      %p57 = scmp.eq.s32.totalorder %s19, 1
      %p58 = por %p56, %p57
      %p59 = scmp.ne.s32.totalorder %s48, %s49
      %p60 = scmp.eq.s32.totalorder %s19, 0
      %p61 = por %p59, %p60
      %p62 = scmp.ne.s32.totalorder %s48, %s49
      %p63 = scmp.eq.s32.totalorder %s20, 1
      %p64 = por %p62, %p63
      %p66 = scmp.ne.s32.totalorder %s49, %s65
      %p67 = scmp.eq.s32.totalorder %s20, 0
      %p68 = por %p66, %p67
      %s70 = sadd.s32 %s69, 1
      %p73 = scmp.eq.s32.totalorder %s14, 1
      %p74 = scmp.ne.s32.totalorder %s69, %s71
      %p75 = scmp.eq.s32.totalorder %s14, 0
      %p76 = por %p74, %p75
      %p77 = scmp.ne.s32.totalorder %s69, %s71
      %p78 = scmp.eq.s32.totalorder %s19, 1
      %p79 = por %p77, %p78
      %p80 = scmp.ne.s32.totalorder %s71, %s72
      %p81 = scmp.eq.s32.totalorder %s19, 0
      %p82 = por %p80, %p81
      %p83 = scmp.ne.s32.totalorder %s71, %s72
      %p84 = scmp.eq.s32.totalorder %s20, 1
      %p85 = por %p83, %p84
      %p87 = scmp.ne.s32.totalorder %s72, %s86
      %p88 = scmp.eq.s32.totalorder %s20, 0
      %p89 = por %p87, %p88
      %s91 = sadd.s32 %s90, 1
      %p94 = scmp.eq.s32.totalorder %s14, 1
      %p95 = scmp.ne.s32.totalorder %s90, %s92
      %p96 = scmp.eq.s32.totalorder %s14, 0
      %p97 = por %p95, %p96
      %p98 = scmp.ne.s32.totalorder %s90, %s92
      %p99 = scmp.eq.s32.totalorder %s19, 1
      %p100 = por %p98, %p99
      %p101 = scmp.ne.s32.totalorder %s92, %s93
      %p102 = scmp.eq.s32.totalorder %s19, 0
      %p103 = por %p101, %p102
      %p104 = scmp.ne.s32.totalorder %s92, %s93
      %p105 = scmp.eq.s32.totalorder %s20, 1
      %p106 = por %p104, %p105
      %p108 = scmp.ne.s32.totalorder %s93, %s107
      %p109 = scmp.eq.s32.totalorder %s20, 0
      %p110 = por %p108, %p109
      %s111 = ssub.s32 %s14, %s21
      %p112 = scmp.eq.s32.totalorder %s111, 0
      %s114 = sadd.s32 %s113, 1
      %s115 = scalar_select %p112, %s113, %s114
      %p118 = pneg %p112
      %p119 = scmp.eq.s32.totalorder %s14, 1
      %p120 = por %p118, %p119
      %p121 = scmp.ne.s32.totalorder %s113, %s116
      %p122 = scmp.eq.s32.totalorder %s14, 0
      %p123 = por %p121, %p122
      %p124 = scmp.ne.s32.totalorder %s113, %s116
      %p125 = scmp.eq.s32.totalorder %s19, 1
      %p126 = por %p124, %p125
      %p127 = scmp.ne.s32.totalorder %s116, %s117
      %p128 = scmp.eq.s32.totalorder %s19, 0
      %p129 = por %p127, %p128
      %p130 = scmp.ne.s32.totalorder %s116, %s117
      %p131 = scmp.eq.s32.totalorder %s20, 1
      %p132 = por %p130, %p131
      %p134 = scmp.ne.s32.totalorder %s117, %s133
      %p135 = scmp.eq.s32.totalorder %s20, 0
      %p136 = por %p134, %p135
      %p137 = scmp.le.s32.totalorder 1, %s14
      %p138 = scmp.lt.s32.totalorder %s14, 3
      %p139 = pnand %p137, %p138
      %p140 = pneg %p139
      // Predicated region
      $region9: #{tpu_custom_call.1} parent=5 // pred_check
        _
      $region10: #{tpu_custom_call.1} parent=5 // pred_check_branch
        %142 = sbr.rel (%p139) target = $region12
      $region11: #{tpu_custom_call.1} parent=5 // pred_region
        %s143 = ssub.s32 %s14, 1
        // Predicated region
        $region13: #{tpu_custom_call.1} parent=11 // pred_check
          %p144 = pneg %p35
        $region14: #{tpu_custom_call.1} parent=11 // pred_check_branch
          %146 = sbr.rel (%p144) target = $region16
        $region15: #{tpu_custom_call.1} parent=11 // pred_region
          _
        $region16: #{tpu_custom_call.1} parent=11 // pred_fallthru
          _
        // Predicated region
        $region17: #{tpu_custom_call.1} parent=11 // pred_check
          %p147 = pneg %p82
        $region18: #{tpu_custom_call.1} parent=11 // pred_check_branch
          %149 = sbr.rel (%p147) target = $region20
        $region19: #{tpu_custom_call.1} parent=11 // pred_region
          _
        $region20: #{tpu_custom_call.1} parent=11 // pred_fallthru
          _
        // Predicated region
        $region21: #{tpu_custom_call.1} parent=11 // pred_check
          %p150 = pneg %p103
        $region22: #{tpu_custom_call.1} parent=11 // pred_check_branch
          %152 = sbr.rel (%p150) target = $region24
        $region23: #{tpu_custom_call.1} parent=11 // pred_region
          _
        $region24: #{tpu_custom_call.1} parent=11 // pred_fallthru
          _
      $region12: #{tpu_custom_call.1} parent=5 // pred_fallthru
        _
      %p153 = scmp.lt.s32.totalorder %s14, 2
      // Predicated region
      $region25: #{tpu_custom_call.1} parent=5 // pred_check
        %p154 = pneg %p153
      $region26: #{tpu_custom_call.1} parent=5 // pred_check_branch
        %156 = sbr.rel (%p154) target = $region28
      $region27: #{tpu_custom_call.1} parent=5 // pred_region
        // Predicated region
        $region29: #{tpu_custom_call.1} parent=27 // pred_check
          %p157 = pneg %p55
        $region30: #{tpu_custom_call.1} parent=27 // pred_check_branch
          %159 = sbr.rel (%p157) target = $region32
        $region31: #{tpu_custom_call.1} parent=27 // pred_region
          %p160 = scmp.lt.s32.totalorder %s14, 1
          %s161 = scalar_select %p160, %s14, 1
          %s162 = smul.addr %s161, 9
          %s163 = smul.addr %s162, 8
          %s164 = scalar_lea.vmem %s1, %s163
        $region32: #{tpu_custom_call.1} parent=27 // pred_fallthru
          _
      $region28: #{tpu_custom_call.1} parent=5 // pred_fallthru
        _
      %p165 = scmp.le.s32.totalorder 1, %s14
      %p166 = scmp.lt.s32.totalorder %s14, 3
      %p167 = pnand %p165, %p166
      %p168 = pneg %p167
      // Predicated region
      $region33: #{tpu_custom_call.1} parent=5 // pred_check
        _
      $region34: #{tpu_custom_call.1} parent=5 // pred_check_branch
        %170 = sbr.rel (%p167) target = $region36
      $region35: #{tpu_custom_call.1} parent=5 // pred_region
        %s171 = ssub.s32 %s14, 1
        %p172 = pneg %p35
        %p173 = pneg %p32
        %p174 = scmp.lt.s32.totalorder %s19, 1
        %s175 = scalar_select %p174, %s19, 1
        %s176 = smul.addr %s175, 9
        %s177 = smul.addr %s176, 8
        %s178 = scalar_lea.vmem %s1, %s177
        %p179 = pneg %p61
        %p180 = pneg %p58
        %p181 = pneg %p82
        %p182 = pneg %p79
        %p183 = pneg %p103
        %p184 = pneg %p100
        %p185 = pneg %p129
        %p186 = pneg %p126
        %s187 = sand.u32 %s116, 1
        %s188 = scalar_lea.sflag [#allocation4], %s187
        %s189 = sand.u32 %s116, 1
        %s190 = smul.addr %s189, 16
        %s191 = scalar_lea.vmem [#allocation3], %s190
        %p192 = scmp.lt.s32.totalorder %s19, 1
        %s193 = scalar_select %p192, %s19, 1
        %s194 = smul.addr %s193, 9
        %s195 = smul.addr %s194, 8
        %s196 = scalar_lea.vmem %s1, %s195
        %v197 = vld [vmem:[%s196] sm:$0xff]
        %v198 = vld [vmem:[%s196 + $0x8] sm:$0xff]
        %v199 = vld [vmem:[%s196 + $0x10] sm:$0xff]
        %v200 = vld [vmem:[%s196 + $0x18] sm:$0xff]
        %v201 = vld [vmem:[%s196 + $0x20] sm:$0xff]
        %v202 = vld [vmem:[%s196 + $0x28] sm:$0xff]
        %v203 = vld [vmem:[%s2] sm:$0xff]
        %v204 = vld [vmem:[%s2 + $0x8] sm:$0xff]
        %v205 = vld [vmem:[%s2 + $0x10] sm:$0xff]
        %v206 = vld [vmem:[%s2 + $0x18] sm:$0xff]
        %v207 = vld [vmem:[%s2 + $0x20] sm:$0xff]
        %v208 = vld [vmem:[%s2 + $0x28] sm:$0xff]
        %v209 = vld [vmem:[%s2 + $0x30] sm:$0xff]
        %v210 = vld [vmem:[%s2 + $0x38] sm:$0xff]
        %v211 = vld [vmem:[%s2 + $0x40] sm:$0xff]
        %v212 = vld [vmem:[%s2 + $0x48] sm:$0xff]
        %v213 = vld [vmem:[%s2 + $0x50] sm:$0xff]
        %v214 = vld [vmem:[%s2 + $0x58] sm:$0xff]
        %v215 = vld [vmem:[%s2 + $0x60] sm:$0xff]
        %v216 = vld [vmem:[%s2 + $0x68] sm:$0xff]
        %v217 = vld [vmem:[%s2 + $0x70] sm:$0xff]
        %v218 = vld [vmem:[%s2 + $0x78] sm:$0xff]
        %v219 = vld [vmem:[%s2 + $0x80] sm:$0xff]
        %v220 = vld [vmem:[%s2 + $0x88] sm:$0xff]
        %v221 = vld [vmem:[%s2 + $0x90] sm:$0xff]
        %v222 = vld [vmem:[%s2 + $0x98] sm:$0xff]
        %v223 = vld [vmem:[%s2 + $0xa0] sm:$0xff]
        %v224 = vld [vmem:[%s2 + $0xa8] sm:$0xff]
        %v225 = vld [vmem:[%s2 + $0xb0] sm:$0xff]
        %v226 = vld [vmem:[%s2 + $0xb8] sm:$0xff]
        %v227 = vld [vmem:[%s2 + $0xc0] sm:$0xff]
        %v228 = vld [vmem:[%s2 + $0xc8] sm:$0xff]
        %v229 = vld [vmem:[%s2 + $0xd0] sm:$0xff]
        %v230 = vld [vmem:[%s2 + $0xd8] sm:$0xff]
        %v231 = vld [vmem:[%s2 + $0xe0] sm:$0xff]
        %v232 = vld [vmem:[%s2 + $0xe8] sm:$0xff]
        %v233 = vld [vmem:[%s2 + $0xf0] sm:$0xff]
        %v234 = vld [vmem:[%s2 + $0xf8] sm:$0xff]
        %v235 = vld [vmem:[%s2 + $0x100] sm:$0xff]
        %v236 = vld [vmem:[%s2 + $0x108] sm:$0xff]
        %v237 = vld [vmem:[%s2 + $0x110] sm:$0xff]
        %v238 = vld [vmem:[%s2 + $0x118] sm:$0xff]
        %v239 = vld [vmem:[%s2 + $0x120] sm:$0xff]
        %v240 = vld [vmem:[%s2 + $0x128] sm:$0xff]
        %v241 = vld [vmem:[%s2 + $0x130] sm:$0xff]
        %v242 = vld [vmem:[%s2 + $0x138] sm:$0xff]
        %v243 = vld [vmem:[%s2 + $0x140] sm:$0xff]
        %v244 = vld [vmem:[%s2 + $0x148] sm:$0xff]
        %v245 = vld [vmem:[%s2 + $0x150] sm:$0xff]
        %v246 = vld [vmem:[%s2 + $0x158] sm:$0xff]
        %v247 = vld [vmem:[%s2 + $0x160] sm:$0xff]
        %v248 = vld [vmem:[%s2 + $0x168] sm:$0xff]
        %v249 = vld [vmem:[%s2 + $0x170] sm:$0xff]
        %v250 = vld [vmem:[%s2 + $0x178] sm:$0x3]
        %v251 = vld [vmem:[%s196] sm:$0xfe]
        %v252 = vld [vmem:[%s196 + $0x8] sm:$0xfe]
        %v253 = vld [vmem:[%s196 + $0x10] sm:$0xfe]
        %v254 = vld [vmem:[%s196 + $0x30] sm:$0x1]
        %v255 = vld [vmem:[%s196 + $0x38] sm:$0x1]
        %v256 = vld [vmem:[%s196 + $0x40] sm:$0x1]
        %s257 = scalar_lea.vmem %s2, 384
        %v258 = vld [vmem:[%s257] sm:$0xff]
        %v259 = vld [vmem:[%s257 + $0x8] sm:$0xff]
        %v260 = vld [vmem:[%s257 + $0x10] sm:$0xff]
        %v261 = vld [vmem:[%s257 + $0x18] sm:$0xff]
        %v262 = vld [vmem:[%s257 + $0x20] sm:$0xff]
        %v263 = vld [vmem:[%s257 + $0x28] sm:$0xff]
        %v264 = vld [vmem:[%s257 + $0x30] sm:$0xff]
        %v265 = vld [vmem:[%s257 + $0x38] sm:$0xff]
        %v266 = vld [vmem:[%s257 + $0x40] sm:$0xff]
        %v267 = vld [vmem:[%s257 + $0x48] sm:$0xff]
        %v268 = vld [vmem:[%s257 + $0x50] sm:$0xff]
        %v269 = vld [vmem:[%s257 + $0x58] sm:$0xff]
        %v270 = vld [vmem:[%s257 + $0x60] sm:$0xff]
        %v271 = vld [vmem:[%s257 + $0x68] sm:$0xff]
        %v272 = vld [vmem:[%s257 + $0x70] sm:$0xff]
        %v273 = vld [vmem:[%s257 + $0x78] sm:$0xff]
        %v274 = vld [vmem:[%s257 + $0x80] sm:$0xff]
        %v275 = vld [vmem:[%s257 + $0x88] sm:$0xff]
        %v276 = vld [vmem:[%s257 + $0x90] sm:$0xff]
        %v277 = vld [vmem:[%s257 + $0x98] sm:$0xff]
        %v278 = vld [vmem:[%s257 + $0xa0] sm:$0xff]
        %v279 = vld [vmem:[%s257 + $0xa8] sm:$0xff]
        %v280 = vld [vmem:[%s257 + $0xb0] sm:$0xff]
        %v281 = vld [vmem:[%s257 + $0xb8] sm:$0xff]
        %v282 = vld [vmem:[%s257 + $0xc0] sm:$0xff]
        %v283 = vld [vmem:[%s257 + $0xc8] sm:$0xff]
        %v284 = vld [vmem:[%s257 + $0xd0] sm:$0xff]
        %v285 = vld [vmem:[%s257 + $0xd8] sm:$0xff]
        %v286 = vld [vmem:[%s257 + $0xe0] sm:$0xff]
        %v287 = vld [vmem:[%s257 + $0xe8] sm:$0xff]
        %v288 = vld [vmem:[%s257 + $0xf0] sm:$0xff]
        %v289 = vld [vmem:[%s257 + $0xf8] sm:$0xff]
        %v290 = vld [vmem:[%s257 + $0x100] sm:$0xff]
        %v291 = vld [vmem:[%s257 + $0x108] sm:$0xff]
        %v292 = vld [vmem:[%s257 + $0x110] sm:$0xff]
        %v293 = vld [vmem:[%s257 + $0x118] sm:$0xff]
        %v294 = vld [vmem:[%s257 + $0x120] sm:$0xff]
        %v295 = vld [vmem:[%s257 + $0x128] sm:$0xff]
        %v296 = vld [vmem:[%s257 + $0x130] sm:$0xff]
        %v297 = vld [vmem:[%s257 + $0x138] sm:$0xff]
        %v298 = vld [vmem:[%s257 + $0x140] sm:$0xff]
        %v299 = vld [vmem:[%s257 + $0x148] sm:$0xff]
        %v300 = vld [vmem:[%s257 + $0x150] sm:$0xff]
        %v301 = vld [vmem:[%s257 + $0x158] sm:$0xff]
        %v302 = vld [vmem:[%s257 + $0x160] sm:$0xff]
        %v303 = vld [vmem:[%s257 + $0x168] sm:$0xff]
        %v304 = vld [vmem:[%s257 + $0x170] sm:$0xff]
        %v305 = vld [vmem:[%s257 + $0x178] sm:$0x3]
        %vm315 = vcmask 1046528
        %v316 = vrot.slane %v251, 1
        %v317 = vrot.slane %v200, 1
        %v318 = vsel %vm315, %v316, %v317
        %v319 = vrot.slane %v252, 1
        %v320 = vrot.slane %v201, 1
        %v321 = vsel %vm315, %v319, %v320
        %v322 = vrot.slane %v253, 1
        %v323 = vrot.slane %v202, 1
        %v324 = vsel %vm315, %v322, %v323
        %v325 = vrot.slane %v254, 1
        %v326 = vsel %vm315, %v317, %v325
        %v327 = vrot.slane %v255, 1
        %v328 = vsel %vm315, %v320, %v327
        %v329 = vrot.slane %v256, 1
        %v330 = vsel %vm315, %v323, %v329
        %vm335 = vcmask 998400
        %v336 = vsel %vm335, %v324, 0
        %v338 = vsel %vm335, %v330, 0
        %vm340 = vcmask 1041408
        %v342 = vsel %vm340, %v305, 0
        %344 = vmatpush.msra.mxu0 %v273
        %345 = vmatpush.msra.mxu0 %v272
        %346 = vmatpush.msra.mxu0 %v271
        %347 = vmatpush.msra.mxu0 %v270
        %348 = vmatpush.msra.mxu0 %v269
        %349 = vmatpush.msra.mxu0 %v268
        %350 = vmatpush.msra.mxu0 %v267
        %351 = vmatpush.msra.mxu0 %v266
        %352 = vmatpush.msra.mxu0 %v265
        %353 = vmatpush.msra.mxu0 %v264
        %354 = vmatpush.msra.mxu0 %v263
        %355 = vmatpush.msra.mxu0 %v262
        %356 = vmatpush.msra.mxu0 %v261
        %357 = vmatpush.msra.mxu0 %v260
        %358 = vmatpush.msra.mxu0 %v259
        %359 = vmatpush.msra.mxu0 %v258
        %360 = vmatmul.f32.gmra.mxu0 %v318
        %v361 = vpop.f32.mrf.mxu0
        %v362 = vadd.f32 0.0, %v361
        %363 = vmatmul.f32.gmra.mxu0 %v326
        %v364 = vpop.f32.mrf.mxu0
        %v365 = vadd.f32 0.0, %v364
        %366 = vdwg.mxu0
        %367 = vmatpush.msra.mxu0 %v289
        %368 = vmatpush.msra.mxu0 %v288
        %369 = vmatpush.msra.mxu0 %v287
        %370 = vmatpush.msra.mxu0 %v286
        %371 = vmatpush.msra.mxu0 %v285
        %372 = vmatpush.msra.mxu0 %v284
        %373 = vmatpush.msra.mxu0 %v283
        %374 = vmatpush.msra.mxu0 %v282
        %375 = vmatpush.msra.mxu0 %v281
        %376 = vmatpush.msra.mxu0 %v280
        %377 = vmatpush.msra.mxu0 %v279
        %378 = vmatpush.msra.mxu0 %v278
        %379 = vmatpush.msra.mxu0 %v277
        %380 = vmatpush.msra.mxu0 %v276
        %381 = vmatpush.msra.mxu0 %v275
        %382 = vmatpush.msra.mxu0 %v274
        %383 = vmatmul.f32.gmra.mxu0 %v321
        %v384 = vpop.f32.mrf.mxu0
        %v385 = vadd.f32 %v362, %v384
        %386 = vmatmul.f32.gmra.mxu0 %v328
        %v387 = vpop.f32.mrf.mxu0
        %v388 = vadd.f32 %v365, %v387
        %389 = vdwg.mxu0
        %390 = vmatpush.msra.mxu0 %v342
        %391 = vmatpush.msra.mxu0 %v304
        %392 = vmatpush.msra.mxu0 %v303
        %393 = vmatpush.msra.mxu0 %v302
        %394 = vmatpush.msra.mxu0 %v301
        %395 = vmatpush.msra.mxu0 %v300
        %396 = vmatpush.msra.mxu0 %v299
        %397 = vmatpush.msra.mxu0 %v298
        %398 = vmatpush.msra.mxu0 %v297
        %399 = vmatpush.msra.mxu0 %v296
        %400 = vmatpush.msra.mxu0 %v295
        %401 = vmatpush.msra.mxu0 %v294
        %402 = vmatpush.msra.mxu0 %v293
        %403 = vmatpush.msra.mxu0 %v292
        %404 = vmatpush.msra.mxu0 %v291
        %405 = vmatpush.msra.mxu0 %v290
        %406 = vmatmul.f32.gmra.mxu0 %v336
        %v407 = vpop.f32.mrf.mxu0
        %v408 = vadd.f32 %v385, %v407
        %409 = vmatmul.f32.gmra.mxu0 %v338
        %v410 = vpop.f32.mrf.mxu0
        %v411 = vadd.f32 %v388, %v410
        %412 = vdwg.mxu0
        %v414 = vsel %vm335, %v199, 0
        %v416 = vsel %vm335, %v202, 0
        %v419 = vsel %vm340, %v250, 0
        %421 = vmatpush.msra.mxu0 %v218
        %422 = vmatpush.msra.mxu0 %v217
        %423 = vmatpush.msra.mxu0 %v216
        %424 = vmatpush.msra.mxu0 %v215
        %425 = vmatpush.msra.mxu0 %v214
        %426 = vmatpush.msra.mxu0 %v213
        %427 = vmatpush.msra.mxu0 %v212
        %428 = vmatpush.msra.mxu0 %v211
        %429 = vmatpush.msra.mxu0 %v210
        %430 = vmatpush.msra.mxu0 %v209
        %431 = vmatpush.msra.mxu0 %v208
        %432 = vmatpush.msra.mxu0 %v207
        %433 = vmatpush.msra.mxu0 %v206
        %434 = vmatpush.msra.mxu0 %v205
        %435 = vmatpush.msra.mxu0 %v204
        %436 = vmatpush.msra.mxu0 %v203
        %437 = vmatmul.f32.gmra.mxu0 %v197
        %v438 = vpop.f32.mrf.mxu0
        %v439 = vadd.f32 %v408, %v438
        %440 = vmatmul.f32.gmra.mxu0 %v200
        %v441 = vpop.f32.mrf.mxu0
        %v442 = vadd.f32 %v411, %v441
        %443 = vdwg.mxu0
        %444 = vmatpush.msra.mxu0 %v234
        %445 = vmatpush.msra.mxu0 %v233
        %446 = vmatpush.msra.mxu0 %v232
        %447 = vmatpush.msra.mxu0 %v231
        %448 = vmatpush.msra.mxu0 %v230
        %449 = vmatpush.msra.mxu0 %v229
        %450 = vmatpush.msra.mxu0 %v228
        %451 = vmatpush.msra.mxu0 %v227
        %452 = vmatpush.msra.mxu0 %v226
        %453 = vmatpush.msra.mxu0 %v225
        %454 = vmatpush.msra.mxu0 %v224
        %455 = vmatpush.msra.mxu0 %v223
        %456 = vmatpush.msra.mxu0 %v222
        %457 = vmatpush.msra.mxu0 %v221
        %458 = vmatpush.msra.mxu0 %v220
        %459 = vmatpush.msra.mxu0 %v219
        %460 = vmatmul.f32.gmra.mxu0 %v198
        %v461 = vpop.f32.mrf.mxu0
        %v462 = vadd.f32 %v439, %v461
        %463 = vmatmul.f32.gmra.mxu0 %v201
        %v464 = vpop.f32.mrf.mxu0
        %v465 = vadd.f32 %v442, %v464
        %466 = vdwg.mxu0
        %467 = vmatpush.msra.mxu0 %v419
        %468 = vmatpush.msra.mxu0 %v249
        %469 = vmatpush.msra.mxu0 %v248
        %470 = vmatpush.msra.mxu0 %v247
        %471 = vmatpush.msra.mxu0 %v246
        %472 = vmatpush.msra.mxu0 %v245
        %473 = vmatpush.msra.mxu0 %v244
        %474 = vmatpush.msra.mxu0 %v243
        %475 = vmatpush.msra.mxu0 %v242
        %476 = vmatpush.msra.mxu0 %v241
        %477 = vmatpush.msra.mxu0 %v240
        %478 = vmatpush.msra.mxu0 %v239
        %479 = vmatpush.msra.mxu0 %v238
        %480 = vmatpush.msra.mxu0 %v237
        %481 = vmatpush.msra.mxu0 %v236
        %482 = vmatpush.msra.mxu0 %v235
        %483 = vmatmul.f32.gmra.mxu0 %v414
        %v484 = vpop.f32.mrf.mxu0
        %v485 = vadd.f32 %v462, %v484
        %486 = vmatmul.f32.gmra.mxu0 %v416
        %v487 = vpop.f32.mrf.mxu0
        %v488 = vadd.f32 %v465, %v487
        %489 = vdwg.mxu0
        %v490 = vld [vmem:[%s196] sm:$0xfc]
        %v491 = vld [vmem:[%s196 + $0x8] sm:$0xfc]
        %v492 = vld [vmem:[%s196 + $0x10] sm:$0xfc]
        %v493 = vld [vmem:[%s196 + $0x30] sm:$0x3]
        %v494 = vld [vmem:[%s196 + $0x38] sm:$0x3]
        %v495 = vld [vmem:[%s196 + $0x40] sm:$0x3]
        %s496 = scalar_lea.vmem %s2, 768
        %v497 = vld [vmem:[%s496] sm:$0xff]
        %v498 = vld [vmem:[%s496 + $0x8] sm:$0xff]
        %v499 = vld [vmem:[%s496 + $0x10] sm:$0xff]
        %v500 = vld [vmem:[%s496 + $0x18] sm:$0xff]
        %v501 = vld [vmem:[%s496 + $0x20] sm:$0xff]
        %v502 = vld [vmem:[%s496 + $0x28] sm:$0xff]
        %v503 = vld [vmem:[%s496 + $0x30] sm:$0xff]
        %v504 = vld [vmem:[%s496 + $0x38] sm:$0xff]
        %v505 = vld [vmem:[%s496 + $0x40] sm:$0xff]
        %v506 = vld [vmem:[%s496 + $0x48] sm:$0xff]
        %v507 = vld [vmem:[%s496 + $0x50] sm:$0xff]
        %v508 = vld [vmem:[%s496 + $0x58] sm:$0xff]
        %v509 = vld [vmem:[%s496 + $0x60] sm:$0xff]
        %v510 = vld [vmem:[%s496 + $0x68] sm:$0xff]
        %v511 = vld [vmem:[%s496 + $0x70] sm:$0xff]
        %v512 = vld [vmem:[%s496 + $0x78] sm:$0xff]
        %v513 = vld [vmem:[%s496 + $0x80] sm:$0xff]
        %v514 = vld [vmem:[%s496 + $0x88] sm:$0xff]
        %v515 = vld [vmem:[%s496 + $0x90] sm:$0xff]
        %v516 = vld [vmem:[%s496 + $0x98] sm:$0xff]
        %v517 = vld [vmem:[%s496 + $0xa0] sm:$0xff]
        %v518 = vld [vmem:[%s496 + $0xa8] sm:$0xff]
        %v519 = vld [vmem:[%s496 + $0xb0] sm:$0xff]
        %v520 = vld [vmem:[%s496 + $0xb8] sm:$0xff]
        %v521 = vld [vmem:[%s496 + $0xc0] sm:$0xff]
        %v522 = vld [vmem:[%s496 + $0xc8] sm:$0xff]
        %v523 = vld [vmem:[%s496 + $0xd0] sm:$0xff]
        %v524 = vld [vmem:[%s496 + $0xd8] sm:$0xff]
        %v525 = vld [vmem:[%s496 + $0xe0] sm:$0xff]
        %v526 = vld [vmem:[%s496 + $0xe8] sm:$0xff]
        %v527 = vld [vmem:[%s496 + $0xf0] sm:$0xff]
        %v528 = vld [vmem:[%s496 + $0xf8] sm:$0xff]
        %v529 = vld [vmem:[%s496 + $0x100] sm:$0xff]
        %v530 = vld [vmem:[%s496 + $0x108] sm:$0xff]
        %v531 = vld [vmem:[%s496 + $0x110] sm:$0xff]
        %v532 = vld [vmem:[%s496 + $0x118] sm:$0xff]
        %v533 = vld [vmem:[%s496 + $0x120] sm:$0xff]
        %v534 = vld [vmem:[%s496 + $0x128] sm:$0xff]
        %v535 = vld [vmem:[%s496 + $0x130] sm:$0xff]
        %v536 = vld [vmem:[%s496 + $0x138] sm:$0xff]
        %v537 = vld [vmem:[%s496 + $0x140] sm:$0xff]
        %v538 = vld [vmem:[%s496 + $0x148] sm:$0xff]
        %v539 = vld [vmem:[%s496 + $0x150] sm:$0xff]
        %v540 = vld [vmem:[%s496 + $0x158] sm:$0xff]
        %v541 = vld [vmem:[%s496 + $0x160] sm:$0xff]
        %v542 = vld [vmem:[%s496 + $0x168] sm:$0xff]
        %v543 = vld [vmem:[%s496 + $0x170] sm:$0xff]
        %v544 = vld [vmem:[%s496 + $0x178] sm:$0x3]
        %vm551 = vcmask 1045504
        %v552 = vrot.slane %v490, 2
        %v553 = vrot.slane %v200, 2
        %v554 = vsel %vm551, %v552, %v553
        %v555 = vrot.slane %v491, 2
        %v556 = vrot.slane %v201, 2
        %v557 = vsel %vm551, %v555, %v556
        %v558 = vrot.slane %v492, 2
        %v559 = vrot.slane %v202, 2
        %v560 = vsel %vm551, %v558, %v559
        %v561 = vrot.slane %v493, 2
        %v562 = vsel %vm551, %v553, %v561
        %v563 = vrot.slane %v494, 2
        %v564 = vsel %vm551, %v556, %v563
        %v565 = vrot.slane %v495, 2
        %v566 = vsel %vm551, %v559, %v565
        %v571 = vsel %vm335, %v560, 0
        %v573 = vsel %vm335, %v566, 0
        %v576 = vsel %vm340, %v544, 0
        %578 = vmatpush.msra.mxu0 %v512
        %579 = vmatpush.msra.mxu0 %v511
        %580 = vmatpush.msra.mxu0 %v510
        %581 = vmatpush.msra.mxu0 %v509
        %582 = vmatpush.msra.mxu0 %v508
        %583 = vmatpush.msra.mxu0 %v507
        %584 = vmatpush.msra.mxu0 %v506
        %585 = vmatpush.msra.mxu0 %v505
        %586 = vmatpush.msra.mxu0 %v504
        %587 = vmatpush.msra.mxu0 %v503
        %588 = vmatpush.msra.mxu0 %v502
        %589 = vmatpush.msra.mxu0 %v501
        %590 = vmatpush.msra.mxu0 %v500
        %591 = vmatpush.msra.mxu0 %v499
        %592 = vmatpush.msra.mxu0 %v498
        %593 = vmatpush.msra.mxu0 %v497
        %594 = vmatmul.f32.gmra.mxu0 %v554
        %v595 = vpop.f32.mrf.mxu0
        %v596 = vadd.f32 0.0, %v595
        %597 = vmatmul.f32.gmra.mxu0 %v562
        %v598 = vpop.f32.mrf.mxu0
        %v599 = vadd.f32 0.0, %v598
        %600 = vdwg.mxu0
        %601 = vmatpush.msra.mxu0 %v528
        %602 = vmatpush.msra.mxu0 %v527
        %603 = vmatpush.msra.mxu0 %v526
        %604 = vmatpush.msra.mxu0 %v525
        %605 = vmatpush.msra.mxu0 %v524
        %606 = vmatpush.msra.mxu0 %v523
        %607 = vmatpush.msra.mxu0 %v522
        %608 = vmatpush.msra.mxu0 %v521
        %609 = vmatpush.msra.mxu0 %v520
        %610 = vmatpush.msra.mxu0 %v519
        %611 = vmatpush.msra.mxu0 %v518
        %612 = vmatpush.msra.mxu0 %v517
        %613 = vmatpush.msra.mxu0 %v516
        %614 = vmatpush.msra.mxu0 %v515
        %615 = vmatpush.msra.mxu0 %v514
        %616 = vmatpush.msra.mxu0 %v513
        %617 = vmatmul.f32.gmra.mxu0 %v557
        %v618 = vpop.f32.mrf.mxu0
        %v619 = vadd.f32 %v596, %v618
        %620 = vmatmul.f32.gmra.mxu0 %v564
        %v621 = vpop.f32.mrf.mxu0
        %v622 = vadd.f32 %v599, %v621
        %623 = vdwg.mxu0
        %624 = vmatpush.msra.mxu0 %v576
        %625 = vmatpush.msra.mxu0 %v543
        %626 = vmatpush.msra.mxu0 %v542
        %627 = vmatpush.msra.mxu0 %v541
        %628 = vmatpush.msra.mxu0 %v540
        %629 = vmatpush.msra.mxu0 %v539
        %630 = vmatpush.msra.mxu0 %v538
        %631 = vmatpush.msra.mxu0 %v537
        %632 = vmatpush.msra.mxu0 %v536
        %633 = vmatpush.msra.mxu0 %v535
        %634 = vmatpush.msra.mxu0 %v534
        %635 = vmatpush.msra.mxu0 %v533
        %636 = vmatpush.msra.mxu0 %v532
        %637 = vmatpush.msra.mxu0 %v531
        %638 = vmatpush.msra.mxu0 %v530
        %639 = vmatpush.msra.mxu0 %v529
        %640 = vmatmul.f32.gmra.mxu0 %v571
        %v641 = vpop.f32.mrf.mxu0
        %v642 = vadd.f32 %v619, %v641
        %643 = vmatmul.f32.gmra.mxu0 %v573
        %v644 = vpop.f32.mrf.mxu0
        %v645 = vadd.f32 %v622, %v644
        %646 = vdwg.mxu0
        %v647 = vadd.f32 %v485, %v642
        %v648 = vadd.f32 %v488, %v645
        %s649 = sld [smem:[#allocation2]]
        %v650 = vstv %s649
        %v651 = vadd.f32 %v647, %v650
        %v652 = vadd.f32 %v648, %v650
        %v653 = vxor.u32 %v651, 2147483648
        %v654 = vxor.u32 %v652, 2147483648
        %v655 = vmul.f32 %v653, 1.442695
        %v656 = vpow.pop %v655
        %v657 = vmul.f32 %v654, 1.442695
        %v658 = vpow.pop %v657
        %v659 = vadd.f32 %v656, 1.0
        %v660 = vadd.f32 %v658, 1.0
        %v661 = vrcp.pop %v659
        %v662 = vmul.f32 %v659, %v661
        %v663 = vsub.f32 1.0, %v662
        %v664 = vmul.f32 %v661, %v663
        %v665 = vadd.f32 %v661, %v664
        %vm666 = vweird.f32 %v659
        %vm667 = vweird.f32 %v661
        %vm668 = vmor %vm666, %vm667
        %v669 = vsel %vm668, %v661, %v665
        %v670 = vand.u32 2147483647, %v659
        %vm671 = vcmp.eq.f32.partialorder %v670, 8.507059e+37
        %v672 = vand.u32 %v659, 2147483648
        %v673 = vor.u32 1.1754944e-38, %v672
        %v674 = vsel %vm671, %v673, %v669
        %v675 = vmul.f32 1.0, %v674
        %v676 = vrcp.pop %v660
        %v677 = vmul.f32 %v660, %v676
        %v678 = vsub.f32 1.0, %v677
        %v679 = vmul.f32 %v676, %v678
        %v680 = vadd.f32 %v676, %v679
        %vm681 = vweird.f32 %v660
        %vm682 = vweird.f32 %v676
        %vm683 = vmor %vm681, %vm682
        %v684 = vsel %vm683, %v676, %v680
        %v685 = vand.u32 2147483647, %v660
        %vm686 = vcmp.eq.f32.partialorder %v685, 8.507059e+37
        %v687 = vand.u32 %v660, 2147483648
        %v688 = vor.u32 1.1754944e-38, %v687
        %v689 = vsel %vm686, %v688, %v684
        %v690 = vmul.f32 1.0, %v689
        %v691 = vld [vmem:[%s3] sm:$0xff]
        %v692 = vld [vmem:[%s3 + $0x8] sm:$0xff]
        %vm693 = vcmask 130048
        %v695 = vsel %vm693, %v675, 0
        %v698 = vsel %vm693, %v690, 0
        %700 = vmatpush.msra.mxu0 0.0
        %701 = vmatpush.msra.mxu0 0.0
        %702 = vmatpush.msra.mxu0 0.0
        %703 = vmatpush.msra.mxu0 0.0
        %704 = vmatpush.msra.mxu0 0.0
        %705 = vmatpush.msra.mxu0 0.0
        %706 = vmatpush.msra.mxu0 0.0
        %707 = vmatpush.msra.mxu0 0.0
        %708 = vmatpush.msra.mxu0 0.0
        %709 = vmatpush.msra.mxu0 0.0
        %710 = vmatpush.msra.mxu0 0.0
        %711 = vmatpush.msra.mxu0 0.0
        %712 = vmatpush.msra.mxu0 0.0
        %713 = vmatpush.msra.mxu0 0.0
        %714 = vmatpush.msra.mxu0 %v692
        %715 = vmatpush.msra.mxu0 %v691
        %716 = vmatmul.f32.gmra.mxu0 %v695
        %v717 = vpop.f32.mrf.mxu0
        %v718 = vadd.f32 0.0, %v717
        %719 = vmatmul.f32.gmra.mxu0 %v698
        %v720 = vpop.f32.mrf.mxu0
        %v721 = vadd.f32 0.0, %v720
        %722 = vdwg.mxu0
        %723 = vst [vmem:[%s191] sm:$0xff] %v718
        %724 = vst [vmem:[%s191 + $0x8] sm:$0xff] %v721
        %s725 = sand.u32 %s116, 1
        %s726 = scalar_lea.sflag [#allocation4], %s725
        %s727 = sand.u32 %s116, 1
        %s728 = smul.addr %s727, 16
        %s729 = scalar_lea.vmem [#allocation3], %s728
        // Predicated region
        $region37: #{tpu_custom_call.1} parent=35 // pred_check
          %p730 = pneg %p126
        $region38: #{tpu_custom_call.1} parent=35 // pred_check_branch
          %732 = sbr.rel (%p730) target = $region40
        $region39: #{tpu_custom_call.1} parent=35 // pred_region
          %734 = vsyncadd %s726, 0
          %s735 = smul.addr %s19, 2
          %s736 = smul.addr %s735, 8
          %s737 = scalar_lea.hbm %s4, %s736
          %s738 = sshll.u32 %s729, 4
          %s739 = int_to_ptr.vmem [resolvable:$true] %s738
          %s740 = sshll.u32 %s737, 4
          %s741 = int_to_ptr.hbm [resolvable:$true] %s740
          %746 = dma.vmem_to_hbm [thread:$0]  %s739, 256, %s741, %s726, 128, 128, 8
        $region40: #{tpu_custom_call.1} parent=35 // pred_fallthru
          _
      $region36: #{tpu_custom_call.1} parent=5 // pred_fallthru
        _
      %p747 = scmp.le.s32.totalorder 2, %s14
      // Predicated region
      $region41: #{tpu_custom_call.1} parent=5 // pred_check
        %p748 = pneg %p747
      $region42: #{tpu_custom_call.1} parent=5 // pred_check_branch
        %750 = sbr.rel (%p748) target = $region44
      $region43: #{tpu_custom_call.1} parent=5 // pred_region
        %s751 = ssub.s32 %s14, 2
        // Predicated region
        $region45: #{tpu_custom_call.1} parent=43 // pred_check
          %p752 = pneg %p132
        $region46: #{tpu_custom_call.1} parent=43 // pred_check_branch
          %754 = sbr.rel (%p752) target = $region48
        $region47: #{tpu_custom_call.1} parent=43 // pred_region
          %s755 = sand.u32 %s117, 1
          %s756 = scalar_lea.sflag [#allocation4], %s755
          %s757 = sand.u32 %s117, 1
          %s758 = smul.addr %s757, 16
          %s759 = scalar_lea.vmem [#allocation3], %s758
          %761 = dma.done %s756, 256
        $region48: #{tpu_custom_call.1} parent=43 // pred_fallthru
          _
      $region44: #{tpu_custom_call.1} parent=5 // pred_fallthru
        _
    $region6: #{tpu_custom_call.1} parent=1 // loop_footer
      %s18 = sadd.s32 1, %s14
    $region7: #{tpu_custom_call.1} parent=1 // loop_footer_branch
      %13 = sbr.rel target = $region3
    $region8: #{tpu_custom_call.1} parent=1 // loop_exit
      _
    %762 = vsyncpa [#allocation4], 1
    %s763 = scalar_lea.sflag [#allocation4], 1
    %764 = vsyncpa %s763, 1

</llo_original>
